<compile_context>
chip_gen: v7x
topology: tpu7x:2x2x1
jax: 0.10.0
libtpu: 0.0.40
codegen_flags: <defaults>
</compile_context>

<pallas_src>
import jax
import jax.numpy as jnp
from jax import lax
from jax.experimental import pallas as pl
from jax.experimental.pallas import tpu as pltpu


def se_gate_kernel(s_ref, w_ref, b_ref, x_ref, o_ref):
    """Fused ReLU -> 1x1 conv (matvec) -> Sigmoid -> broadcast multiply.

    s_ref: (N, Cin)       squeezed SE input (resident across the grid)
    w_ref: (TC, Cin)      conv-weight tile, untransposed PyTorch layout
    b_ref: (1, TC)        conv-bias tile
    x_ref: (N, TC, HW)    feature-map tile, spatial flattened onto lanes
    o_ref: (N, TC, HW)    output tile
    """
    s = jnp.maximum(s_ref[...], 0.0)                                   # ReLU
    # (N, Cin) x (TC, Cin) -> (N, TC); contraction on Cin of both operands,
    # so no transposed copy of the weight is ever materialized.
    gate = lax.dot_general(
        s, w_ref[...],
        dimension_numbers=(((1,), (1,)), ((), ())),
        preferred_element_type=jnp.float32,
    )
    gate = jax.nn.sigmoid(gate + b_ref[...])                           # bias + sigmoid
    # Broadcast the gate over the flattened spatial (lane) axis and scale x433.
    o_ref[...] = (x_ref[...] * gate[:, :, None]).astype(o_ref.dtype)


def se_gate(s, w, b, x, *, tile_cout=1920):
    """s: (N, Cin), w: (Cout, Cin), b: (1, Cout), x: (N, Cout, HW) -> (N, Cout, HW)."""
    N, Cin = s.shape
    Cout = w.shape[0]
    HW = x.shape[2]

    # Lane/sublane-friendly Cout tile: a multiple of 128 unless one tile covers
    # the full Cout (then full-dim blocks are always legal).
    tc = min(tile_cout, Cout)
    if tc < Cout:
        tc = max(128, (tc // 128) * 128)
    grid = (pl.cdiv(Cout, tc),)  # partial last block: OOB output writes are masked

    return pl.pallas_call(
        se_gate_kernel,
        out_shape=jax.ShapeDtypeStruct((N, Cout, HW), x.dtype),
        grid_spec=pltpu.PrefetchScalarGridSpec(
            num_scalar_prefetch=0,
            grid=grid,
            in_specs=[
                pl.BlockSpec((N, Cin), lambda j: (0, 0)),        # s: small, resident
                pl.BlockSpec((tc, Cin), lambda j: (j, 0)),       # W tile (dominant DMA)
                pl.BlockSpec((1, tc), lambda j: (0, j)),         # bias tile
                pl.BlockSpec((N, tc, HW), lambda j: (0, j, 0)),  # x433 tile
            ],
            out_specs=pl.BlockSpec((N, tc, HW), lambda j: (0, j, 0)),
        ),
        compiler_params=pltpu.CompilerParams(
            dimension_semantics=("parallel",),       # Cout tiles shard across TCs (v7x)
            vmem_limit_bytes=48 * 1024 * 1024,       # headroom for double-buffered W tile
        ),
    )(s, w, b, x)


def module_forward(x435, x433, weight, bias, *, tile_cout=1920):
    """Mirrors M.forward.  x435: (N, Cin, 1, 1) NCHW; x433: (N, Cout, H, W) NCHW."""
    N, Cin, _, _ = x435.shape
    _, Cout, H, W = x433.shape

    s = x435.reshape(N, Cin)                 # squeeze 1x1 spatial
    w = weight.reshape(Cout, Cin)            # keep PyTorch layout; NO transpose copy
    b = bias.reshape(1, Cout)
    x_flat = x433.reshape(N, Cout, H * W)    # flatten spatial onto lanes
    # TODO(synk): if the surrounding graph can supply NHWC, put Cout on lanes for
    # unmasked stores; skipped here since an extra transpose of x433 would cost more.

    y = se_gate(s, w, b, x_flat, tile_cout=tile_cout)
    return y.reshape(N, Cout, H, W)          # back to NCHW


if __name__ == "__main__":
    # Small shapes consistent with the module (orig: N=1, Cin=726, Cout=7392, 7x7).
    # Cout=200 with tile_cout=128 exercises the partial-last-block path that the
    # production shape (7392 % 1920 != 0) hits; H=W=7 exercises the masked-lane path.
    N, Cin, Cout, H, W = 2, 64, 200, 7, 7

    key = jax.random.PRNGKey(0)
    k1, k2, k3, k4 = jax.random.split(key, 4)

    x435 = jax.random.normal(k1, (N, Cin, 1, 1), dtype=jnp.float32)   # SE squeeze input
    x433 = jax.random.normal(k2, (N, Cout, H, W), dtype=jnp.float32)  # feature map
    # Deterministic "Conv2d(Cin, Cout, kernel_size=1)" parameters.
    weight = jax.random.normal(k3, (Cout, Cin, 1, 1), dtype=jnp.float32) * 0.02
    bias = jax.random.normal(k4, (Cout,), dtype=jnp.float32) * 0.02

    # Pure-JAX reference.
    s_ref = jnp.maximum(x435.reshape(N, Cin), 0.0)
    gate_ref = jax.nn.sigmoid(s_ref @ weight.reshape(Cout, Cin).T + bias[None, :])
    y_ref = gate_ref[:, :, None, None] * x433

    # Multi-step grid with a partial last block (production-like path).
    y_tiled = module_forward(x435, x433, weight, bias, tile_cout=128)
    y_tiled = jax.block_until_ready(y_tiled)
    assert y_tiled.shape == (N, Cout, H, W)
    assert jnp.allclose(y_tiled, y_ref, atol=1e-5, rtol=1e-5)

    # Default large-tile config (single full-Cout block at this toy size).
    y_big = module_forward(x435, x433, weight, bias)
    y_big = jax.block_until_ready(y_big)
    assert jnp.allclose(y_big, y_ref, atol=1e-5, rtol=1e-5)

    print("KERNEL_OK")
</pallas_src>

<mosaic_0001>
module attributes {stable_mosaic.version = 11 : i64} {
  func.func @se_gate_kernel(%arg0: i32, %arg1: memref<2x64xf32, #tpu.memory_space<vmem>>, %arg2: memref<128x64xf32, #tpu.memory_space<vmem>>, %arg3: memref<1x128xf32, #tpu.memory_space<vmem>>, %arg4: memref<2x128x49xf32, #tpu.memory_space<vmem>>, %arg5: memref<2x128x49xf32, #tpu.memory_space<vmem>>) attributes {dimension_semantics = [#tpu.dimension_semantics<parallel>], iteration_bounds = array<i64: 2>, scalar_prefetch = 0 : i64, scratch_operands = 0 : i64, tpu.core_type = #tpu.core_type<tc>, window_params = [{pipeline_mode = #tpu.pipeline_mode<synchronous>, transform_indices = @transform_0, window_bounds = array<i64: 2, 64>}, {transform_indices = @transform_1, window_bounds = array<i64: 128, 64>}, {transform_indices = @transform_2, window_bounds = array<i64: 1, 128>}, {transform_indices = @transform_3, window_bounds = array<i64: 2, 128, 49>}, {transform_indices = @transform_4, window_bounds = array<i64: 2, 128, 49>}]} {
    %c0 = arith.constant 0 : index
    %c0_0 = arith.constant 0 : index
    %0 = vector.load %arg1[%c0, %c0_0] : memref<2x64xf32, #tpu.memory_space<vmem>>, vector<2x64xf32>
    %cst = arith.constant 0.000000e+00 : f32
    %1 = vector.broadcast %cst : f32 to vector<2x64xf32>
    %2 = arith.maximumf %0, %1 : vector<2x64xf32>
    %c0_1 = arith.constant 0 : index
    %c0_2 = arith.constant 0 : index
    %3 = vector.load %arg2[%c0_1, %c0_2] : memref<128x64xf32, #tpu.memory_space<vmem>>, vector<128x64xf32>
    %cst_3 = arith.constant dense<0.000000e+00> : vector<2x128xf32>
    %4 = tpu.matmul %2, %3, %cst_3 {dimension_numbers = #tpu.dot_dimension_numbers<[1], [1], [0], [0], [0, 0, 1, 0], [], []>} : vector<2x64xf32>, vector<128x64xf32>, vector<2x128xf32> -> vector<2x128xf32>
    %c0_4 = arith.constant 0 : index
    %c0_5 = arith.constant 0 : index
    %5 = vector.load %arg3[%c0_4, %c0_5] : memref<1x128xf32, #tpu.memory_space<vmem>>, vector<1x128xf32>
    %6 = vector.broadcast %5 : vector<1x128xf32> to vector<2x128xf32>
    %7 = arith.addf %4, %6 : vector<2x128xf32>
    %8 = arith.negf %7 : vector<2x128xf32>
    %9 = math.exp %8 : vector<2x128xf32>
    %cst_6 = arith.constant 1.000000e+00 : f32
    %10 = vector.broadcast %cst_6 : f32 to vector<2x128xf32>
    %11 = arith.addf %10, %9 : vector<2x128xf32>
    %12 = arith.divf %10, %11 : vector<2x128xf32>
    %c0_7 = arith.constant 0 : index
    %c0_8 = arith.constant 0 : index
    %c0_9 = arith.constant 0 : index
    %13 = vector.load %arg4[%c0_7, %c0_8, %c0_9] : memref<2x128x49xf32, #tpu.memory_space<vmem>>, vector<2x128x49xf32>
    %14 = vector.shape_cast %12 : vector<2x128xf32> to vector<2x128x1xf32>
    %15 = vector.broadcast %14 : vector<2x128x1xf32> to vector<2x128x49xf32>
    %16 = arith.mulf %13, %15 : vector<2x128x49xf32>
    %c0_10 = arith.constant 0 : index
    %c0_11 = arith.constant 0 : index
    %c0_12 = arith.constant 0 : index
    %17 = vector.load %arg5[%c0_10, %c0_11, %c0_12] : memref<2x128x49xf32, #tpu.memory_space<vmem>>, vector<2x128x49xf32>
    tpu.vector_store %arg5[%c0_10, %c0_11, %c0_12], %16 {strides = array<i32>} : memref<2x128x49xf32, #tpu.memory_space<vmem>>, vector<2x128x49xf32>,
    return
  }
  func.func @transform_0(%arg0: i32) -> (i32, i32) {
    %c0_i32 = arith.constant 0 : i32
    %c0_i32_0 = arith.constant 0 : i32
    %c0_i32_1 = arith.constant 0 : i32
    return %c0_i32, %c0_i32_0 : i32, i32
  }
  func.func @transform_1(%arg0: i32) -> (i32, i32) {
    %c0_i32 = arith.constant 0 : i32
    %c0_i32_0 = arith.constant 0 : i32
    return %arg0, %c0_i32 : i32, i32
  }
  func.func @transform_2(%arg0: i32) -> (i32, i32) {
    %c0_i32 = arith.constant 0 : i32
    %c0_i32_0 = arith.constant 0 : i32
    return %c0_i32, %arg0 : i32, i32
  }
  func.func @transform_3(%arg0: i32) -> (i32, i32, i32) {
    %c0_i32 = arith.constant 0 : i32
    %c0_i32_0 = arith.constant 0 : i32
    %c0_i32_1 = arith.constant 0 : i32
    return %c0_i32, %arg0, %c0_i32_0 : i32, i32, i32
  }
  func.func @transform_4(%arg0: i32) -> (i32, i32, i32) {
    %c0_i32 = arith.constant 0 : i32
    %c0_i32_0 = arith.constant 0 : i32
    %c0_i32_1 = arith.constant 0 : i32
    return %c0_i32, %arg0, %c0_i32_0 : i32, i32, i32
  }
}

</mosaic_0001>

<llo_original>
// kernel: tpu_custom_call.1
$region0: #{tpu_custom_call.1}
  #allocation0 [shape = 'u32[]', space=smem, size = 0x4, offset = 0x4, fixed_abs, tag = 'smem constant byte address 0x4 - core index']
  #allocation1 [shape = 'u32[144,128]{1,0:T(1,128)}', space=vmem, size = 0x12000, scoped, tag = 'internal scratch']
  %s0 = inlined_call_operand.vmem [shape: f32[2,64], index: 0, kind: input, shape index: {}]
  %s1 = inlined_call_operand.vmem [shape: f32[200,64], index: 1, kind: input, shape index: {}]
  %s2 = inlined_call_operand.vmem [shape: f32[1,200], index: 2, kind: input, shape index: {}]
  %s3 = inlined_call_operand.vmem [shape: f32[2,200,49], index: 3, kind: input, shape index: {}]
  %s4 = inlined_call_operand.vmem [shape: f32[2,200,49], index: 4, kind: output, shape index: {}]
  %s5 = sld [smem:[#allocation0]]
  $region149: #{tpu_custom_call.1} parent=0
    _
  %s7 = ssub.s32 1, %s5
  %s8 = scalar_select 0, %s7, %s5
  $region1: #{tpu_custom_call.1} parent=0
    #allocation2 [shape = 'u8[262144]{0}', space=vmem, size = 0x40000, scoped, tag = 'input window, operand 3']
    #allocation3 [shape = 'u8[262144]{0}', space=vmem, size = 0x40000, scoped, tag = 'output window, operand 0']
    loop: start=0, step=1, limit=4
    $region2: #{tpu_custom_call.1} parent=1 // loop_pre_header
      _
    $region3: #{tpu_custom_call.1} parent=1 // loop_header
      %s10 = sphi 0, %s14
      %p11 = scmp.ge.s32.totalorder %s10, 4
      %s18 = sphi 0, %s18
      %s20 = sphi 0, %s18
      %s21 = sphi 0, %s20
      %s35 = sphi 0, %s21
      %s41 = sphi 0, %s43
      %s44 = sphi 0, %s41
      %s45 = sphi 0, %s44
      %s61 = sphi 0, %s45
      %s67 = sphi 0, %s69
      %s70 = sphi 0, %s67
      %s71 = sphi 0, %s70
      %s87 = sphi 0, %s71
      %s93 = sphi 0, %s95
      %s96 = sphi 0, %s93
      %s97 = sphi 0, %s96
      %s113 = sphi 0, %s97
      %s119 = sphi 0, %s121
      %s122 = sphi 0, %s119
      %s123 = sphi 0, %s122
      %s139 = sphi 0, %s123
    $region4: #{tpu_custom_call.1} parent=1 // loop_header_branch
      %13 = sbr.rel (%p11) target = $region8
    $region5: #{tpu_custom_call.1} parent=1 // loop_body
      %s15 = ssub.s32 %s10, 1
      %s16 = ssub.s32 %s10, 2
      %s17 = sadd.s32 %s10, 1
      %s19 = sadd.s32 %s18, 1
      %p22 = scmp.eq.s32.totalorder %s10, 1
      %p23 = scmp.ne.s32.totalorder %s18, %s20
      %p24 = scmp.eq.s32.totalorder %s10, 0
      %p25 = por %p23, %p24
      %p26 = scmp.ne.s32.totalorder %s18, %s20
      %p27 = scmp.eq.s32.totalorder %s15, 1
      %p28 = por %p26, %p27
      %p29 = scmp.ne.s32.totalorder %s20, %s21
      %p30 = scmp.eq.s32.totalorder %s15, 0
      %p31 = por %p29, %p30
      %p32 = scmp.ne.s32.totalorder %s20, %s21
      %p33 = scmp.eq.s32.totalorder %s16, 1
      %p34 = por %p32, %p33
      %p36 = scmp.ne.s32.totalorder %s21, %s35
      %p37 = scmp.eq.s32.totalorder %s16, 0
      %p38 = por %p36, %p37
      %s39 = ssub.s32 %s10, %s17
      %p40 = scmp.eq.s32.totalorder %s39, 0
      %s42 = sadd.s32 %s41, 1
      %s43 = scalar_select %p40, %s41, %s42
      %p46 = pneg %p40
      %p47 = scmp.eq.s32.totalorder %s10, 1
      %p48 = por %p46, %p47
      %p49 = scmp.ne.s32.totalorder %s41, %s44
      %p50 = scmp.eq.s32.totalorder %s10, 0
      %p51 = por %p49, %p50
      %p52 = scmp.ne.s32.totalorder %s41, %s44
      %p53 = scmp.eq.s32.totalorder %s15, 1
      %p54 = por %p52, %p53
      %p55 = scmp.ne.s32.totalorder %s44, %s45
      %p56 = scmp.eq.s32.totalorder %s15, 0
      %p57 = por %p55, %p56
      %p58 = scmp.ne.s32.totalorder %s44, %s45
      %p59 = scmp.eq.s32.totalorder %s16, 1
      %p60 = por %p58, %p59
      %p62 = scmp.ne.s32.totalorder %s45, %s61
      %p63 = scmp.eq.s32.totalorder %s16, 0
      %p64 = por %p62, %p63
      %s65 = ssub.s32 %s10, %s17
      %p66 = scmp.eq.s32.totalorder %s65, 0
      %s68 = sadd.s32 %s67, 1
      %s69 = scalar_select %p66, %s67, %s68
      %p72 = pneg %p66
      %p73 = scmp.eq.s32.totalorder %s10, 1
      %p74 = por %p72, %p73
      %p75 = scmp.ne.s32.totalorder %s67, %s70
      %p76 = scmp.eq.s32.totalorder %s10, 0
      %p77 = por %p75, %p76
      %p78 = scmp.ne.s32.totalorder %s67, %s70
      %p79 = scmp.eq.s32.totalorder %s15, 1
      %p80 = por %p78, %p79
      %p81 = scmp.ne.s32.totalorder %s70, %s71
      %p82 = scmp.eq.s32.totalorder %s15, 0
      %p83 = por %p81, %p82
      %p84 = scmp.ne.s32.totalorder %s70, %s71
      %p85 = scmp.eq.s32.totalorder %s16, 1
      %p86 = por %p84, %p85
      %p88 = scmp.ne.s32.totalorder %s71, %s87
      %p89 = scmp.eq.s32.totalorder %s16, 0
      %p90 = por %p88, %p89
      %s91 = ssub.s32 %s10, %s17
      %p92 = scmp.eq.s32.totalorder %s91, 0
      %s94 = sadd.s32 %s93, 1
      %s95 = scalar_select %p92, %s93, %s94
      %p98 = pneg %p92
      %p99 = scmp.eq.s32.totalorder %s10, 1
      %p100 = por %p98, %p99
      %p101 = scmp.ne.s32.totalorder %s93, %s96
      %p102 = scmp.eq.s32.totalorder %s10, 0
      %p103 = por %p101, %p102
      %p104 = scmp.ne.s32.totalorder %s93, %s96
      %p105 = scmp.eq.s32.totalorder %s15, 1
      %p106 = por %p104, %p105
      %p107 = scmp.ne.s32.totalorder %s96, %s97
      %p108 = scmp.eq.s32.totalorder %s15, 0
      %p109 = por %p107, %p108
      %p110 = scmp.ne.s32.totalorder %s96, %s97
      %p111 = scmp.eq.s32.totalorder %s16, 1
      %p112 = por %p110, %p111
      %p114 = scmp.ne.s32.totalorder %s97, %s113
      %p115 = scmp.eq.s32.totalorder %s16, 0
      %p116 = por %p114, %p115
      %s117 = ssub.s32 %s10, %s17
      %p118 = scmp.eq.s32.totalorder %s117, 0
      %s120 = sadd.s32 %s119, 1
      %s121 = scalar_select %p118, %s119, %s120
      %p124 = pneg %p118
      %p125 = scmp.eq.s32.totalorder %s10, 1
      %p126 = por %p124, %p125
      %p127 = scmp.ne.s32.totalorder %s119, %s122
      %p128 = scmp.eq.s32.totalorder %s10, 0
      %p129 = por %p127, %p128
      %p130 = scmp.ne.s32.totalorder %s119, %s122
      %p131 = scmp.eq.s32.totalorder %s15, 1
      %p132 = por %p130, %p131
      %p133 = scmp.ne.s32.totalorder %s122, %s123
      %p134 = scmp.eq.s32.totalorder %s15, 0
      %p135 = por %p133, %p134
      %p136 = scmp.ne.s32.totalorder %s122, %s123
      %p137 = scmp.eq.s32.totalorder %s16, 1
      %p138 = por %p136, %p137
      %p140 = scmp.ne.s32.totalorder %s123, %s139
      %p141 = scmp.eq.s32.totalorder %s16, 0
      %p142 = por %p140, %p141
      %p143 = scmp.le.s32.totalorder 1, %s10
      %p144 = scmp.lt.s32.totalorder %s10, 3
      %p145 = pnand %p143, %p144
      %p146 = pneg %p145
      // Predicated region
      $region9: #{tpu_custom_call.1} parent=5 // pred_check
        _
      $region10: #{tpu_custom_call.1} parent=5 // pred_check_branch
        %148 = sbr.rel (%p145) target = $region12
      $region11: #{tpu_custom_call.1} parent=5 // pred_region
        %s149 = ssub.s32 %s10, 1
        // Predicated region
        $region13: #{tpu_custom_call.1} parent=11 // pred_check
          %p150 = pneg %p31
        $region14: #{tpu_custom_call.1} parent=11 // pred_check_branch
          %152 = sbr.rel (%p150) target = $region16
        $region15: #{tpu_custom_call.1} parent=11 // pred_region
          _
        $region16: #{tpu_custom_call.1} parent=11 // pred_fallthru
          _
      $region12: #{tpu_custom_call.1} parent=5 // pred_fallthru
        _
      %p153 = scmp.lt.s32.totalorder %s10, 2
      // Predicated region
      $region17: #{tpu_custom_call.1} parent=5 // pred_check
        %p154 = pneg %p153
      $region18: #{tpu_custom_call.1} parent=5 // pred_check_branch
        %156 = sbr.rel (%p154) target = $region20
      $region19: #{tpu_custom_call.1} parent=5 // pred_region
        // Predicated region
        $region21: #{tpu_custom_call.1} parent=19 // pred_check
          %p157 = pneg %p51
        $region22: #{tpu_custom_call.1} parent=19 // pred_check_branch
          %159 = sbr.rel (%p157) target = $region24
        $region23: #{tpu_custom_call.1} parent=19 // pred_region
          %s160 = smul.u32 16, %s10
          %s161 = ssub.s32 25, %s160
          %p162 = scmp.lt.s32.totalorder %s161, 16
          %s163 = scalar_select %p162, %s161, 16
          %s164 = smul.u32 128, %s163
          %p165 = scmp.lt.s32.totalorder %s160, 24
          %s166 = scalar_select %p165, %s160, 24
          %s167 = smul.addr %s166, 8
          %s168 = scalar_lea.vmem %s1, %s167
          %s169 = smul.u32 16, %s10
          %s170 = ssub.s32 25, %s169
          %p171 = scmp.lt.s32.totalorder %s170, 16
          %s172 = scalar_select %p171, %s170, 16
          %s173 = smul.u32 128, %s172
        $region24: #{tpu_custom_call.1} parent=19 // pred_fallthru
          _
        // Predicated region
        $region25: #{tpu_custom_call.1} parent=19 // pred_check
          %p174 = pneg %p77
        $region26: #{tpu_custom_call.1} parent=19 // pred_check_branch
          %176 = sbr.rel (%p174) target = $region28
        $region27: #{tpu_custom_call.1} parent=19 // pred_region
          %p177 = scmp.lt.s32.totalorder %s10, 1
          %s178 = scalar_select %p177, %s10, 1
          %s179 = scalar_lea.vmem %s2, %s178
        $region28: #{tpu_custom_call.1} parent=19 // pred_fallthru
          _
        // Predicated region
        $region29: #{tpu_custom_call.1} parent=19 // pred_check
          %p180 = pneg %p103
        $region30: #{tpu_custom_call.1} parent=19 // pred_check_branch
          %182 = sbr.rel (%p180) target = $region32
        $region31: #{tpu_custom_call.1} parent=19 // pred_region
          %s183 = sand.u32 %s93, 1
          %s184 = sand.u32 %s93, 1
          %s185 = smul.addr %s184, 256
          %s186 = scalar_lea.vmem [#allocation2], %s185
          %s187 = smul.u32 16, %s10
          %s188 = ssub.s32 25, %s187
          %p189 = scmp.lt.s32.totalorder %s188, 16
          %s190 = scalar_select %p189, %s188, 16
          %s191 = smul.u32 256, %s190
          %p192 = scmp.ne.s32.totalorder 0, %s191
          %s193 = smul.addr %s187, 8
          %s194 = scalar_lea.vmem %s3, %s193
          // Predicated region
          $region33: #{tpu_custom_call.1} parent=31 // pred_check
            %p195 = pneg %p192
          $region34: #{tpu_custom_call.1} parent=31 // pred_check_branch
            %197 = sbr.rel (%p195) target = $region36
          $region35: #{tpu_custom_call.1} parent=31 // pred_region
            // Predicated region
            $region37: #{tpu_custom_call.1} parent=35 // pred_check
              _
            $region38: #{tpu_custom_call.1} parent=35 // pred_check_branch
              %199 = sbr.rel (0) target = $region40
            $region39: #{tpu_custom_call.1} parent=35 // pred_region
              // Predicated region
              $region59: #{tpu_custom_call.1} parent=39 // pred_check
                _
              $region60: #{tpu_custom_call.1} parent=39 // pred_check_branch
                %312 = sbr.rel (0) target = $region62
              $region61: #{tpu_custom_call.1} parent=39 // pred_region
                %s313 = sshrl.u32 %s190, 4
                // While loop
                $region63: #{tpu_custom_call.1} parent=61 // loop_pre_header
                  _
                $region64: #{tpu_custom_call.1} parent=61 // loop_header
                  %s315 = sphi 0, %s317
                  %p316 = scmp.ge.s32.totalorder %s315, %s313
                  %s320 = sphi 0, %s389
                  %s321 = sphi %s194, %s392
                  %s322 = sphi %s186, %s393
                $region65: #{tpu_custom_call.1} parent=61 // loop_header_branch
                  %319 = sbr.rel (%p316) target = $region69
                $region66: #{tpu_custom_call.1} parent=61 // loop_body
                  %v323 = vld [vmem:[%s321] sm:$0xff]
                  %324 = vst [vmem:[%s322] sm:$0xff] %v323
                  %v325 = vld [vmem:[%s321 + $0x8] sm:$0xff]
                  %326 = vst [vmem:[%s322 + $0x8] sm:$0xff] %v325
                  %v327 = vld [vmem:[%s321 + $0x10] sm:$0xff]
                  %328 = vst [vmem:[%s322 + $0x10] sm:$0xff] %v327
                  %v329 = vld [vmem:[%s321 + $0x18] sm:$0xff]
                  %330 = vst [vmem:[%s322 + $0x18] sm:$0xff] %v329
                  %v331 = vld [vmem:[%s321 + $0x20] sm:$0xff]
                  %332 = vst [vmem:[%s322 + $0x20] sm:$0xff] %v331
                  %v333 = vld [vmem:[%s321 + $0x28] sm:$0xff]
                  %334 = vst [vmem:[%s322 + $0x28] sm:$0xff] %v333
                  %v335 = vld [vmem:[%s321 + $0x30] sm:$0xff]
                  %336 = vst [vmem:[%s322 + $0x30] sm:$0xff] %v335
                  %v337 = vld [vmem:[%s321 + $0x38] sm:$0xff]
                  %338 = vst [vmem:[%s322 + $0x38] sm:$0xff] %v337
                  %v339 = vld [vmem:[%s321 + $0x40] sm:$0xff]
                  %340 = vst [vmem:[%s322 + $0x40] sm:$0xff] %v339
                  %v341 = vld [vmem:[%s321 + $0x48] sm:$0xff]
                  %342 = vst [vmem:[%s322 + $0x48] sm:$0xff] %v341
                  %v343 = vld [vmem:[%s321 + $0x50] sm:$0xff]
                  %344 = vst [vmem:[%s322 + $0x50] sm:$0xff] %v343
                  %v345 = vld [vmem:[%s321 + $0x58] sm:$0xff]
                  %346 = vst [vmem:[%s322 + $0x58] sm:$0xff] %v345
                  %v347 = vld [vmem:[%s321 + $0x60] sm:$0xff]
                  %348 = vst [vmem:[%s322 + $0x60] sm:$0xff] %v347
                  %v349 = vld [vmem:[%s321 + $0x68] sm:$0xff]
                  %350 = vst [vmem:[%s322 + $0x68] sm:$0xff] %v349
                  %v351 = vld [vmem:[%s321 + $0x70] sm:$0xff]
                  %352 = vst [vmem:[%s322 + $0x70] sm:$0xff] %v351
                  %v353 = vld [vmem:[%s321 + $0x78] sm:$0xff]
                  %354 = vst [vmem:[%s322 + $0x78] sm:$0xff] %v353
                  %v355 = vld [vmem:[%s321 + $0xc8] sm:$0xff]
                  %356 = vst [vmem:[%s322 + $0x80] sm:$0xff] %v355
                  %v357 = vld [vmem:[%s321 + $0xd0] sm:$0xff]
                  %358 = vst [vmem:[%s322 + $0x88] sm:$0xff] %v357
                  %v359 = vld [vmem:[%s321 + $0xd8] sm:$0xff]
                  %360 = vst [vmem:[%s322 + $0x90] sm:$0xff] %v359
                  %v361 = vld [vmem:[%s321 + $0xe0] sm:$0xff]
                  %362 = vst [vmem:[%s322 + $0x98] sm:$0xff] %v361
                  %v363 = vld [vmem:[%s321 + $0xe8] sm:$0xff]
                  %364 = vst [vmem:[%s322 + $0xa0] sm:$0xff] %v363
                  %v365 = vld [vmem:[%s321 + $0xf0] sm:$0xff]
                  %366 = vst [vmem:[%s322 + $0xa8] sm:$0xff] %v365
                  %v367 = vld [vmem:[%s321 + $0xf8] sm:$0xff]
                  %368 = vst [vmem:[%s322 + $0xb0] sm:$0xff] %v367
                  %v369 = vld [vmem:[%s321 + $0x100] sm:$0xff]
                  %370 = vst [vmem:[%s322 + $0xb8] sm:$0xff] %v369
                  %v371 = vld [vmem:[%s321 + $0x108] sm:$0xff]
                  %372 = vst [vmem:[%s322 + $0xc0] sm:$0xff] %v371
                  %v373 = vld [vmem:[%s321 + $0x110] sm:$0xff]
                  %374 = vst [vmem:[%s322 + $0xc8] sm:$0xff] %v373
                  %v375 = vld [vmem:[%s321 + $0x118] sm:$0xff]
                  %376 = vst [vmem:[%s322 + $0xd0] sm:$0xff] %v375
                  %v377 = vld [vmem:[%s321 + $0x120] sm:$0xff]
                  %378 = vst [vmem:[%s322 + $0xd8] sm:$0xff] %v377
                  %v379 = vld [vmem:[%s321 + $0x128] sm:$0xff]
                  %380 = vst [vmem:[%s322 + $0xe0] sm:$0xff] %v379
                  %v381 = vld [vmem:[%s321 + $0x130] sm:$0xff]
                  %382 = vst [vmem:[%s322 + $0xe8] sm:$0xff] %v381
                  %v383 = vld [vmem:[%s321 + $0x138] sm:$0xff]
                  %384 = vst [vmem:[%s322 + $0xf0] sm:$0xff] %v383
                  %v385 = vld [vmem:[%s321 + $0x140] sm:$0xff]
                  %386 = vst [vmem:[%s322 + $0xf8] sm:$0xff] %v385
                  %s387 = sadd.s32 1, %s320
                  %p388 = scmp.ge.s32.totalorder %s387, %s313
                  %s389 = scalar_select %p388, 0, %s387
                  %s390 = smul.u32 %s389, 128
                  %s391 = smul.u32 %s389, 128
                  %s392 = scalar_lea.vmem %s194, %s390
                  %s393 = scalar_lea.vmem %s186, %s391 [#allocation2]
                $region67: #{tpu_custom_call.1} parent=61 // loop_footer
                  %s317 = sadd.s32 %s315, 1
                $region68: #{tpu_custom_call.1} parent=61 // loop_footer_branch
                  %314 = sbr.rel target = $region64
                $region69: #{tpu_custom_call.1} parent=61 // loop_exit
                  _
                %s394 = sshrl.u32 %s190, 4
                %s395 = sand.u32 %s190, 15
                %s396 = smul.u32 %s394, 16
                %s397 = smul.u32 8, %s396
                %s398 = scalar_lea.vmem %s194, %s397
                %s399 = smul.u32 8, %s396
                %s400 = scalar_lea.vmem %s186, %s399 [#allocation2]
                // While loop
                $region70: #{tpu_custom_call.1} parent=61 // loop_pre_header
                  _
                $region71: #{tpu_custom_call.1} parent=61 // loop_header
                  %s402 = sphi 0, %s404
                  %p403 = scmp.ge.s32.totalorder %s402, %s395
                  %s407 = sphi 0, %s416
                  %s408 = sphi %s398, %s419
                  %s409 = sphi %s400, %s420
                $region72: #{tpu_custom_call.1} parent=61 // loop_header_branch
                  %406 = sbr.rel (%p403) target = $region76
                $region73: #{tpu_custom_call.1} parent=61 // loop_body
                  %v410 = vld [vmem:[%s408] sm:$0xff]
                  %411 = vst [vmem:[%s409] sm:$0xff] %v410
                  %v412 = vld [vmem:[%s408 + $0xc8] sm:$0xff]
                  %413 = vst [vmem:[%s409 + $0x80] sm:$0xff] %v412
                  %s414 = sadd.s32 1, %s407
                  %p415 = scmp.ge.s32.totalorder %s414, %s395
                  %s416 = scalar_select %p415, 0, %s414
                  %s417 = smul.u32 %s416, 8
                  %s418 = smul.u32 %s416, 8
                  %s419 = scalar_lea.vmem %s398, %s417
                  %s420 = scalar_lea.vmem %s400, %s418 [#allocation2]
                $region74: #{tpu_custom_call.1} parent=61 // loop_footer
                  %s404 = sadd.s32 %s402, 1
                $region75: #{tpu_custom_call.1} parent=61 // loop_footer_branch
                  %401 = sbr.rel target = $region71
                $region76: #{tpu_custom_call.1} parent=61 // loop_exit
                  _
              $region62: #{tpu_custom_call.1} parent=39 // pred_fallthru
                _
              // Predicated region
              $region77: #{tpu_custom_call.1} parent=39 // pred_check
                _
              $region78: #{tpu_custom_call.1} parent=39 // pred_check_branch
                %422 = sbr.rel target = $region80
              $region79: #{tpu_custom_call.1} parent=39 // pred_region
                _
              $region80: #{tpu_custom_call.1} parent=39 // pred_fallthru
                _
            $region40: #{tpu_custom_call.1} parent=35 // pred_fallthru
              _
            // Predicated region
            $region41: #{tpu_custom_call.1} parent=35 // pred_check
              _
            $region42: #{tpu_custom_call.1} parent=35 // pred_check_branch
              %201 = sbr.rel target = $region44
            $region43: #{tpu_custom_call.1} parent=35 // pred_region
              %s203 = sshrl.u32 %s190, 4
              // While loop
              $region45: #{tpu_custom_call.1} parent=43 // loop_pre_header
                _
              $region46: #{tpu_custom_call.1} parent=43 // loop_header
                %s205 = sphi 0, %s207
                %p206 = scmp.ge.s32.totalorder %s205, %s203
                %s210 = sphi 0, %s279
                %s211 = sphi %s194, %s282
                %s212 = sphi %s186, %s283
              $region47: #{tpu_custom_call.1} parent=43 // loop_header_branch
                %209 = sbr.rel (%p206) target = $region51
              $region48: #{tpu_custom_call.1} parent=43 // loop_body
                %v213 = vld [vmem:[%s211] sm:$0xff]
                %214 = vst [vmem:[%s212] sm:$0xff] %v213
                %v215 = vld [vmem:[%s211 + $0x8] sm:$0xff]
                %216 = vst [vmem:[%s212 + $0x8] sm:$0xff] %v215
                %v217 = vld [vmem:[%s211 + $0x10] sm:$0xff]
                %218 = vst [vmem:[%s212 + $0x10] sm:$0xff] %v217
                %v219 = vld [vmem:[%s211 + $0x18] sm:$0xff]
                %220 = vst [vmem:[%s212 + $0x18] sm:$0xff] %v219
                %v221 = vld [vmem:[%s211 + $0x20] sm:$0xff]
                %222 = vst [vmem:[%s212 + $0x20] sm:$0xff] %v221
                %v223 = vld [vmem:[%s211 + $0x28] sm:$0xff]
                %224 = vst [vmem:[%s212 + $0x28] sm:$0xff] %v223
                %v225 = vld [vmem:[%s211 + $0x30] sm:$0xff]
                %226 = vst [vmem:[%s212 + $0x30] sm:$0xff] %v225
                %v227 = vld [vmem:[%s211 + $0x38] sm:$0xff]
                %228 = vst [vmem:[%s212 + $0x38] sm:$0xff] %v227
                %v229 = vld [vmem:[%s211 + $0x40] sm:$0xff]
                %230 = vst [vmem:[%s212 + $0x40] sm:$0xff] %v229
                %v231 = vld [vmem:[%s211 + $0x48] sm:$0xff]
                %232 = vst [vmem:[%s212 + $0x48] sm:$0xff] %v231
                %v233 = vld [vmem:[%s211 + $0x50] sm:$0xff]
                %234 = vst [vmem:[%s212 + $0x50] sm:$0xff] %v233
                %v235 = vld [vmem:[%s211 + $0x58] sm:$0xff]
                %236 = vst [vmem:[%s212 + $0x58] sm:$0xff] %v235
                %v237 = vld [vmem:[%s211 + $0x60] sm:$0xff]
                %238 = vst [vmem:[%s212 + $0x60] sm:$0xff] %v237
                %v239 = vld [vmem:[%s211 + $0x68] sm:$0xff]
                %240 = vst [vmem:[%s212 + $0x68] sm:$0xff] %v239
                %v241 = vld [vmem:[%s211 + $0x70] sm:$0xff]
                %242 = vst [vmem:[%s212 + $0x70] sm:$0xff] %v241
                %v243 = vld [vmem:[%s211 + $0x78] sm:$0xff]
                %244 = vst [vmem:[%s212 + $0x78] sm:$0xff] %v243
                %v245 = vld [vmem:[%s211 + $0xc8] sm:$0xff]
                %246 = vst [vmem:[%s212 + $0x80] sm:$0xff] %v245
                %v247 = vld [vmem:[%s211 + $0xd0] sm:$0xff]
                %248 = vst [vmem:[%s212 + $0x88] sm:$0xff] %v247
                %v249 = vld [vmem:[%s211 + $0xd8] sm:$0xff]
                %250 = vst [vmem:[%s212 + $0x90] sm:$0xff] %v249
                %v251 = vld [vmem:[%s211 + $0xe0] sm:$0xff]
                %252 = vst [vmem:[%s212 + $0x98] sm:$0xff] %v251
                %v253 = vld [vmem:[%s211 + $0xe8] sm:$0xff]
                %254 = vst [vmem:[%s212 + $0xa0] sm:$0xff] %v253
                %v255 = vld [vmem:[%s211 + $0xf0] sm:$0xff]
                %256 = vst [vmem:[%s212 + $0xa8] sm:$0xff] %v255
                %v257 = vld [vmem:[%s211 + $0xf8] sm:$0xff]
                %258 = vst [vmem:[%s212 + $0xb0] sm:$0xff] %v257
                %v259 = vld [vmem:[%s211 + $0x100] sm:$0xff]
                %260 = vst [vmem:[%s212 + $0xb8] sm:$0xff] %v259
                %v261 = vld [vmem:[%s211 + $0x108] sm:$0xff]
                %262 = vst [vmem:[%s212 + $0xc0] sm:$0xff] %v261
                %v263 = vld [vmem:[%s211 + $0x110] sm:$0xff]
                %264 = vst [vmem:[%s212 + $0xc8] sm:$0xff] %v263
                %v265 = vld [vmem:[%s211 + $0x118] sm:$0xff]
                %266 = vst [vmem:[%s212 + $0xd0] sm:$0xff] %v265
                %v267 = vld [vmem:[%s211 + $0x120] sm:$0xff]
                %268 = vst [vmem:[%s212 + $0xd8] sm:$0xff] %v267
                %v269 = vld [vmem:[%s211 + $0x128] sm:$0xff]
                %270 = vst [vmem:[%s212 + $0xe0] sm:$0xff] %v269
                %v271 = vld [vmem:[%s211 + $0x130] sm:$0xff]
                %272 = vst [vmem:[%s212 + $0xe8] sm:$0xff] %v271
                %v273 = vld [vmem:[%s211 + $0x138] sm:$0xff]
                %274 = vst [vmem:[%s212 + $0xf0] sm:$0xff] %v273
                %v275 = vld [vmem:[%s211 + $0x140] sm:$0xff]
                %276 = vst [vmem:[%s212 + $0xf8] sm:$0xff] %v275
                %s277 = sadd.s32 1, %s210
                %p278 = scmp.ge.s32.totalorder %s277, %s203
                %s279 = scalar_select %p278, 0, %s277
                %s280 = smul.u32 %s279, 128
                %s281 = smul.u32 %s279, 128
                %s282 = scalar_lea.vmem %s194, %s280
                %s283 = scalar_lea.vmem %s186, %s281 [#allocation2]
              $region49: #{tpu_custom_call.1} parent=43 // loop_footer
                %s207 = sadd.s32 %s205, 1
              $region50: #{tpu_custom_call.1} parent=43 // loop_footer_branch
                %204 = sbr.rel target = $region46
              $region51: #{tpu_custom_call.1} parent=43 // loop_exit
                _
              %s284 = sshrl.u32 %s190, 4
              %s285 = sand.u32 %s190, 15
              %s286 = smul.u32 %s284, 16
              %s287 = smul.u32 8, %s286
              %s288 = scalar_lea.vmem %s194, %s287
              %s289 = smul.u32 8, %s286
              %s290 = scalar_lea.vmem %s186, %s289 [#allocation2]
              // While loop
              $region52: #{tpu_custom_call.1} parent=43 // loop_pre_header
                _
              $region53: #{tpu_custom_call.1} parent=43 // loop_header
                %s292 = sphi 0, %s294
                %p293 = scmp.ge.s32.totalorder %s292, %s285
                %s297 = sphi 0, %s306
                %s298 = sphi %s288, %s309
                %s299 = sphi %s290, %s310
              $region54: #{tpu_custom_call.1} parent=43 // loop_header_branch
                %296 = sbr.rel (%p293) target = $region58
              $region55: #{tpu_custom_call.1} parent=43 // loop_body
                %v300 = vld [vmem:[%s298] sm:$0xff]
                %301 = vst [vmem:[%s299] sm:$0xff] %v300
                %v302 = vld [vmem:[%s298 + $0xc8] sm:$0xff]
                %303 = vst [vmem:[%s299 + $0x80] sm:$0xff] %v302
                %s304 = sadd.s32 1, %s297
                %p305 = scmp.ge.s32.totalorder %s304, %s285
                %s306 = scalar_select %p305, 0, %s304
                %s307 = smul.u32 %s306, 8
                %s308 = smul.u32 %s306, 8
                %s309 = scalar_lea.vmem %s288, %s307
                %s310 = scalar_lea.vmem %s290, %s308 [#allocation2]
              $region56: #{tpu_custom_call.1} parent=43 // loop_footer
                %s294 = sadd.s32 %s292, 1
              $region57: #{tpu_custom_call.1} parent=43 // loop_footer_branch
                %291 = sbr.rel target = $region53
              $region58: #{tpu_custom_call.1} parent=43 // loop_exit
                _
            $region44: #{tpu_custom_call.1} parent=35 // pred_fallthru
              _
          $region36: #{tpu_custom_call.1} parent=31 // pred_fallthru
            _
          %423 = vnop
        $region32: #{tpu_custom_call.1} parent=19 // pred_fallthru
          _
      $region20: #{tpu_custom_call.1} parent=5 // pred_fallthru
        _
      %p424 = scmp.le.s32.totalorder 1, %s10
      %p425 = scmp.lt.s32.totalorder %s10, 3
      %p426 = pnand %p424, %p425
      %p427 = pneg %p426
      // Predicated region
      $region81: #{tpu_custom_call.1} parent=5 // pred_check
        _
      $region82: #{tpu_custom_call.1} parent=5 // pred_check_branch
        %429 = sbr.rel (%p426) target = $region84
      $region83: #{tpu_custom_call.1} parent=5 // pred_region
        %s430 = ssub.s32 %s10, 1
        %s431 = sand.u32 %s96, 1
        %s432 = sand.u32 %s96, 1
        %s433 = smul.addr %s432, 256
        %s434 = scalar_lea.vmem [#allocation2], %s433
        // Predicated region
        $region85: #{tpu_custom_call.1} parent=83 // pred_check
          %p435 = pneg %p109
        $region86: #{tpu_custom_call.1} parent=83 // pred_check_branch
          %437 = sbr.rel (%p435) target = $region88
        $region87: #{tpu_custom_call.1} parent=83 // pred_region
          _
        $region88: #{tpu_custom_call.1} parent=83 // pred_fallthru
          _
        %p438 = pneg %p31
        %p439 = pneg %p28
        %s440 = smul.u32 16, %s15
        %s441 = ssub.s32 25, %s440
        %p442 = scmp.lt.s32.totalorder %s441, 16
        %s443 = scalar_select %p442, %s441, 16
        %s444 = smul.u32 128, %s443
        %p445 = scmp.lt.s32.totalorder %s440, 24
        %s446 = scalar_select %p445, %s440, 24
        %s447 = smul.addr %s446, 8
        %s448 = scalar_lea.vmem %s1, %s447
        %p449 = pneg %p57
        %p450 = pneg %p54
        %p451 = scmp.lt.s32.totalorder %s15, 1
        %s452 = scalar_select %p451, %s15, 1
        %s453 = scalar_lea.vmem %s2, %s452
        %p454 = pneg %p83
        %p455 = pneg %p80
        %s456 = sand.u32 %s96, 1
        %s457 = sand.u32 %s96, 1
        %s458 = smul.addr %s457, 256
        %s459 = scalar_lea.vmem [#allocation2], %s458
        %p460 = pneg %p109
        %p461 = pneg %p106
        %p462 = pneg %p135
        %p463 = pneg %p132
        %s464 = sand.u32 %s122, 1
        %s465 = sand.u32 %s122, 1
        %s466 = smul.addr %s465, 256
        %s467 = scalar_lea.vmem [#allocation3], %s466
        %s468 = smul.u32 16, %s15
        %s469 = ssub.s32 25, %s468
        %p470 = scmp.lt.s32.totalorder %s469, 16
        %s471 = scalar_select %p470, %s469, 16
        %s472 = smul.u32 128, %s471
        %p473 = scmp.lt.s32.totalorder %s468, 24
        %s474 = scalar_select %p473, %s468, 24
        %s475 = smul.addr %s474, 8
        %s476 = scalar_lea.vmem %s1, %s475
        %s477 = smul.u32 16, %s15
        %s478 = ssub.s32 25, %s477
        %p479 = scmp.lt.s32.totalorder %s478, 16
        %s480 = scalar_select %p479, %s478, 16
        %s481 = smul.u32 128, %s480
        %p482 = scmp.lt.s32.totalorder %s15, 1
        %s483 = scalar_select %p482, %s15, 1
        %s484 = scalar_lea.vmem %s2, %s483
        %s485 = smul.u32 16, %s15
        %s486 = ssub.s32 25, %s485
        %p487 = scmp.lt.s32.totalorder %s486, 16
        %s488 = scalar_select %p487, %s486, 16
        %s489 = smul.u32 256, %s488
        %s490 = smul.u32 16, %s15
        %s491 = ssub.s32 25, %s490
        %p492 = scmp.lt.s32.totalorder %s491, 16
        %s493 = scalar_select %p492, %s491, 16
        %s494 = smul.u32 256, %s493
        %v495 = vld [vmem:[%s0] sm:$0x3]
        %v496 = vmax.f32 %v495, 0.0
        %v497 = vld [vmem:[%s476] sm:$0xff]
        %v498 = vld [vmem:[%s476 + $0x8] sm:$0xff]
        %v499 = vld [vmem:[%s476 + $0x10] sm:$0xff]
        %v500 = vld [vmem:[%s476 + $0x18] sm:$0xff]
        %v501 = vld [vmem:[%s476 + $0x20] sm:$0xff]
        %v502 = vld [vmem:[%s476 + $0x28] sm:$0xff]
        %v503 = vld [vmem:[%s476 + $0x30] sm:$0xff]
        %v504 = vld [vmem:[%s476 + $0x38] sm:$0xff]
        %v505 = vld [vmem:[%s476 + $0x40] sm:$0xff]
        %v506 = vld [vmem:[%s476 + $0x48] sm:$0xff]
        %v507 = vld [vmem:[%s476 + $0x50] sm:$0xff]
        %v508 = vld [vmem:[%s476 + $0x58] sm:$0xff]
        %v509 = vld [vmem:[%s476 + $0x60] sm:$0xff]
        %v510 = vld [vmem:[%s476 + $0x68] sm:$0xff]
        %v511 = vld [vmem:[%s476 + $0x70] sm:$0xff]
        %v512 = vld [vmem:[%s476 + $0x78] sm:$0xff]
        %v513 = vld [vmem:[%s484] sm:$0x1]
        %v515 = vlaneseq
        %v516 = vshrl.u32 %v515, 7
        %v517 = vsub.s32 0, %v516
        %v518 = vrot.slane %v513, %v517
        %vm520 = vcmask 523264
        %v522 = vsel %vm520, %v496, 0
        %v525 = vsel %vm520, %v497, 0
        %v528 = vsel %vm520, %v498, 0
        %v531 = vsel %vm520, %v499, 0
        %v534 = vsel %vm520, %v500, 0
        %v537 = vsel %vm520, %v501, 0
        %v540 = vsel %vm520, %v502, 0
        %v543 = vsel %vm520, %v503, 0
        %v546 = vsel %vm520, %v504, 0
        %v549 = vsel %vm520, %v505, 0
        %v552 = vsel %vm520, %v506, 0
        %v555 = vsel %vm520, %v507, 0
        %v558 = vsel %vm520, %v508, 0
        %v561 = vsel %vm520, %v509, 0
        %v564 = vsel %vm520, %v510, 0
        %v567 = vsel %vm520, %v511, 0
        %v570 = vsel %vm520, %v512, 0
        %572 = vmatprep.subr.mxu0 0.0
        %573 = vmatpush1.xpose.msra.mxu0 %v525
        %574 = vmatprep.subr.mxu0 0.0
        %575 = vmatpush1.xpose.msra.mxu0 %v528
        %576 = vmatprep.subr.mxu0 0.0
        %577 = vmatpush1.xpose.msra.mxu0 %v531
        %578 = vmatprep.subr.mxu0 0.0
        %579 = vmatpush1.xpose.msra.mxu0 %v534
        %580 = vmatprep.subr.mxu0 0.0
        %581 = vmatpush1.xpose.msra.mxu0 %v537
        %582 = vmatprep.subr.mxu0 0.0
        %583 = vmatpush1.xpose.msra.mxu0 %v540
        %584 = vmatprep.subr.mxu0 0.0
        %585 = vmatpush1.xpose.msra.mxu0 %v543
        %586 = vmatprep.subr.mxu0 0.0
        %587 = vmatpush1.xpose.msra.mxu0 %v546
        %588 = vmatprep.subr.mxu0 0.0
        %589 = vmatpush1.xpose.msra.mxu0 %v549
        %590 = vmatprep.subr.mxu0 0.0
        %591 = vmatpush1.xpose.msra.mxu0 %v552
        %592 = vmatprep.subr.mxu0 0.0
        %593 = vmatpush1.xpose.msra.mxu0 %v555
        %594 = vmatprep.subr.mxu0 0.0
        %595 = vmatpush1.xpose.msra.mxu0 %v558
        %596 = vmatprep.subr.mxu0 0.0
        %597 = vmatpush1.xpose.msra.mxu0 %v561
        %598 = vmatprep.subr.mxu0 0.0
        %599 = vmatpush1.xpose.msra.mxu0 %v564
        %600 = vmatprep.subr.mxu0 0.0
        %601 = vmatpush1.xpose.msra.mxu0 %v567
        %602 = vmatprep.subr.mxu0 0.0
        %603 = vmatpush1.xpose.msra.mxu0 %v570
        %604 = vmatprep.subr.mxu0 0.0
        %605 = vmatpush1.xpose.msra.mxu0 0.0
        %606 = vmatprep.subr.mxu0 0.0
        %607 = vmatpush1.xpose.msra.mxu0 0.0
        %608 = vmatprep.subr.mxu0 0.0
        %609 = vmatpush1.xpose.msra.mxu0 0.0
        %610 = vmatprep.subr.mxu0 0.0
        %611 = vmatpush1.xpose.msra.mxu0 0.0
        %612 = vmatprep.subr.mxu0 0.0
        %613 = vmatpush1.xpose.msra.mxu0 0.0
        %614 = vmatprep.subr.mxu0 0.0
        %615 = vmatpush1.xpose.msra.mxu0 0.0
        %616 = vmatprep.subr.mxu0 0.0
        %617 = vmatpush1.xpose.msra.mxu0 0.0
        %618 = vmatprep.subr.mxu0 0.0
        %619 = vmatpush1.xpose.msra.mxu0 0.0
        %620 = vmatprep.subr.mxu0 0.0
        %621 = vmatpush1.xpose.msra.mxu0 0.0
        %622 = vmatprep.subr.mxu0 0.0
        %623 = vmatpush1.xpose.msra.mxu0 0.0
        %624 = vmatprep.subr.mxu0 0.0
        %625 = vmatpush1.xpose.msra.mxu0 0.0
        %626 = vmatprep.subr.mxu0 0.0
        %627 = vmatpush1.xpose.msra.mxu0 0.0
        %628 = vmatprep.subr.mxu0 0.0
        %629 = vmatpush1.xpose.msra.mxu0 0.0
        %630 = vmatprep.subr.mxu0 0.0
        %631 = vmatpush1.xpose.msra.mxu0 0.0
        %632 = vmatprep.subr.mxu0 0.0
        %633 = vmatpush1.xpose.msra.mxu0 0.0
        %634 = vmatprep.subr.mxu0 0.0
        %635 = vmatpush1.xpose.msra.mxu0 0.0
        %636 = vmatprep.mubr.f32.mxu0 0.0
        %637 = vmatmul.mubr.f32.gmra.mrb[0].mxu0 %v522
        %v638 = vpop.f32.mrb[0].mxu0
        %v639 = vadd.f32 %v518, %v638
        %v640 = vpop.f32.mrb[0].mxu0
        %641 = vdwg.mxu0
        %v642 = vxor.u32 %v639, 2147483648
        %v643 = vmul.f32 %v642, 1.442695
        %v644 = vpow.pop %v643
        %v645 = vadd.f32 %v644, 1.0
        %v646 = vrcp.pop %v645
        %v647 = vmul.f32 1.0, %v646
        %v648 = vld [vmem:[%s434] sm:$0xff]
        %v649 = vld [vmem:[%s434 + $0x8] sm:$0xff]
        %v650 = vld [vmem:[%s434 + $0x10] sm:$0xff]
        %v651 = vld [vmem:[%s434 + $0x18] sm:$0xff]
        %v652 = vld [vmem:[%s434 + $0x20] sm:$0xff]
        %v653 = vld [vmem:[%s434 + $0x28] sm:$0xff]
        %v654 = vld [vmem:[%s434 + $0x30] sm:$0xff]
        %v655 = vld [vmem:[%s434 + $0x38] sm:$0xff]
        %v656 = vld [vmem:[%s434 + $0x40] sm:$0xff]
        %v657 = vld [vmem:[%s434 + $0x48] sm:$0xff]
        %v658 = vld [vmem:[%s434 + $0x50] sm:$0xff]
        %v659 = vld [vmem:[%s434 + $0x58] sm:$0xff]
        %v660 = vld [vmem:[%s434 + $0x60] sm:$0xff]
        %v661 = vld [vmem:[%s434 + $0x68] sm:$0xff]
        %v662 = vld [vmem:[%s434 + $0x70] sm:$0xff]
        %v663 = vld [vmem:[%s434 + $0x78] sm:$0xff]
        %v664 = vld [vmem:[%s434 + $0x80] sm:$0xff]
        %v665 = vld [vmem:[%s434 + $0x88] sm:$0xff]
        %v666 = vld [vmem:[%s434 + $0x90] sm:$0xff]
        %v667 = vld [vmem:[%s434 + $0x98] sm:$0xff]
        %v668 = vld [vmem:[%s434 + $0xa0] sm:$0xff]
        %v669 = vld [vmem:[%s434 + $0xa8] sm:$0xff]
        %v670 = vld [vmem:[%s434 + $0xb0] sm:$0xff]
        %v671 = vld [vmem:[%s434 + $0xb8] sm:$0xff]
        %v672 = vld [vmem:[%s434 + $0xc0] sm:$0xff]
        %v673 = vld [vmem:[%s434 + $0xc8] sm:$0xff]
        %v674 = vld [vmem:[%s434 + $0xd0] sm:$0xff]
        %v675 = vld [vmem:[%s434 + $0xd8] sm:$0xff]
        %v676 = vld [vmem:[%s434 + $0xe0] sm:$0xff]
        %v677 = vld [vmem:[%s434 + $0xe8] sm:$0xff]
        %v678 = vld [vmem:[%s434 + $0xf0] sm:$0xff]
        %v679 = vld [vmem:[%s434 + $0xf8] sm:$0xff]
        %v680 = vlaneseq
        %v681 = vshrl.u32 %v680, 7
        %v682 = vsub.s32 0, %v681
        %v683 = vrot.slane %v647, %v682
        %685 = vbcast.lane.b32.xlu0 %v683, 256
        %v686 = vpop.permute.xlu0 %685
        %s688 = sor.u32 256, 8
        %689 = vbcast.lane.b32.xlu0 %v683, %s688
        %v690 = vpop.permute.xlu0 %689
        %s692 = sor.u32 256, 16
        %693 = vbcast.lane.b32.xlu0 %v683, %s692
        %v694 = vpop.permute.xlu0 %693
        %s696 = sor.u32 256, 24
        %697 = vbcast.lane.b32.xlu0 %v683, %s696
        %v698 = vpop.permute.xlu0 %697
        %s700 = sor.u32 256, 32
        %701 = vbcast.lane.b32.xlu0 %v683, %s700
        %v702 = vpop.permute.xlu0 %701
        %s704 = sor.u32 256, 40
        %705 = vbcast.lane.b32.xlu0 %v683, %s704
        %v706 = vpop.permute.xlu0 %705
        %s708 = sor.u32 256, 48
        %709 = vbcast.lane.b32.xlu0 %v683, %s708
        %v710 = vpop.permute.xlu0 %709
        %s712 = sor.u32 256, 56
        %713 = vbcast.lane.b32.xlu0 %v683, %s712
        %v714 = vpop.permute.xlu0 %713
        %s716 = sor.u32 256, 64
        %717 = vbcast.lane.b32.xlu0 %v683, %s716
        %v718 = vpop.permute.xlu0 %717
        %s720 = sor.u32 256, 72
        %721 = vbcast.lane.b32.xlu0 %v683, %s720
        %v722 = vpop.permute.xlu0 %721
        %s724 = sor.u32 256, 80
        %725 = vbcast.lane.b32.xlu0 %v683, %s724
        %v726 = vpop.permute.xlu0 %725
        %s728 = sor.u32 256, 88
        %729 = vbcast.lane.b32.xlu0 %v683, %s728
        %v730 = vpop.permute.xlu0 %729
        %s732 = sor.u32 256, 96
        %733 = vbcast.lane.b32.xlu0 %v683, %s732
        %v734 = vpop.permute.xlu0 %733
        %s736 = sor.u32 256, 104
        %737 = vbcast.lane.b32.xlu0 %v683, %s736
        %v738 = vpop.permute.xlu0 %737
        %s740 = sor.u32 256, 112
        %741 = vbcast.lane.b32.xlu0 %v683, %s740
        %v742 = vpop.permute.xlu0 %741
        %s744 = sor.u32 256, 120
        %745 = vbcast.lane.b32.xlu0 %v683, %s744
        %v746 = vpop.permute.xlu0 %745
        %v747 = vlaneseq
        %v748 = vshrl.u32 %v747, 7
        %v749 = vsub.s32 1, %v748
        %v750 = vrot.slane %v647, %v749
        %752 = vbcast.lane.b32.xlu0 %v750, 256
        %v753 = vpop.permute.xlu0 %752
        %s755 = sor.u32 256, 8
        %756 = vbcast.lane.b32.xlu0 %v750, %s755
        %v757 = vpop.permute.xlu0 %756
        %s759 = sor.u32 256, 16
        %760 = vbcast.lane.b32.xlu0 %v750, %s759
        %v761 = vpop.permute.xlu0 %760
        %s763 = sor.u32 256, 24
        %764 = vbcast.lane.b32.xlu0 %v750, %s763
        %v765 = vpop.permute.xlu0 %764
        %s767 = sor.u32 256, 32
        %768 = vbcast.lane.b32.xlu0 %v750, %s767
        %v769 = vpop.permute.xlu0 %768
        %s771 = sor.u32 256, 40
        %772 = vbcast.lane.b32.xlu0 %v750, %s771
        %v773 = vpop.permute.xlu0 %772
        %s775 = sor.u32 256, 48
        %776 = vbcast.lane.b32.xlu0 %v750, %s775
        %v777 = vpop.permute.xlu0 %776
        %s779 = sor.u32 256, 56
        %780 = vbcast.lane.b32.xlu0 %v750, %s779
        %v781 = vpop.permute.xlu0 %780
        %s783 = sor.u32 256, 64
        %784 = vbcast.lane.b32.xlu0 %v750, %s783
        %v785 = vpop.permute.xlu0 %784
        %s787 = sor.u32 256, 72
        %788 = vbcast.lane.b32.xlu0 %v750, %s787
        %v789 = vpop.permute.xlu0 %788
        %s791 = sor.u32 256, 80
        %792 = vbcast.lane.b32.xlu0 %v750, %s791
        %v793 = vpop.permute.xlu0 %792
        %s795 = sor.u32 256, 88
        %796 = vbcast.lane.b32.xlu0 %v750, %s795
        %v797 = vpop.permute.xlu0 %796
        %s799 = sor.u32 256, 96
        %800 = vbcast.lane.b32.xlu0 %v750, %s799
        %v801 = vpop.permute.xlu0 %800
        %s803 = sor.u32 256, 104
        %804 = vbcast.lane.b32.xlu0 %v750, %s803
        %v805 = vpop.permute.xlu0 %804
        %s807 = sor.u32 256, 112
        %808 = vbcast.lane.b32.xlu0 %v750, %s807
        %v809 = vpop.permute.xlu0 %808
        %s811 = sor.u32 256, 120
        %812 = vbcast.lane.b32.xlu0 %v750, %s811
        %v813 = vpop.permute.xlu0 %812
        %v814 = vmul.f32 %v648, %v686
        %v815 = vmul.f32 %v649, %v690
        %v816 = vmul.f32 %v650, %v694
        %v817 = vmul.f32 %v651, %v698
        %v818 = vmul.f32 %v652, %v702
        %v819 = vmul.f32 %v653, %v706
        %v820 = vmul.f32 %v654, %v710
        %v821 = vmul.f32 %v655, %v714
        %v822 = vmul.f32 %v656, %v718
        %v823 = vmul.f32 %v657, %v722
        %v824 = vmul.f32 %v658, %v726
        %v825 = vmul.f32 %v659, %v730
        %v826 = vmul.f32 %v660, %v734
        %v827 = vmul.f32 %v661, %v738
        %v828 = vmul.f32 %v662, %v742
        %v829 = vmul.f32 %v663, %v746
        %v830 = vmul.f32 %v664, %v753
        %v831 = vmul.f32 %v665, %v757
        %v832 = vmul.f32 %v666, %v761
        %v833 = vmul.f32 %v667, %v765
        %v834 = vmul.f32 %v668, %v769
        %v835 = vmul.f32 %v669, %v773
        %v836 = vmul.f32 %v670, %v777
        %v837 = vmul.f32 %v671, %v781
        %v838 = vmul.f32 %v672, %v785
        %v839 = vmul.f32 %v673, %v789
        %v840 = vmul.f32 %v674, %v793
        %v841 = vmul.f32 %v675, %v797
        %v842 = vmul.f32 %v676, %v801
        %v843 = vmul.f32 %v677, %v805
        %v844 = vmul.f32 %v678, %v809
        %v845 = vmul.f32 %v679, %v813
        %vm846 = vcmask 400384
        %847 = vst.msk [vmem:[%s467] sm:$0xff] %vm846, %v814
        %848 = vst.msk [vmem:[%s467 + $0x8] sm:$0xff] %vm846, %v815
        %849 = vst.msk [vmem:[%s467 + $0x10] sm:$0xff] %vm846, %v816
        %850 = vst.msk [vmem:[%s467 + $0x18] sm:$0xff] %vm846, %v817
        %851 = vst.msk [vmem:[%s467 + $0x20] sm:$0xff] %vm846, %v818
        %852 = vst.msk [vmem:[%s467 + $0x28] sm:$0xff] %vm846, %v819
        %853 = vst.msk [vmem:[%s467 + $0x30] sm:$0xff] %vm846, %v820
        %854 = vst.msk [vmem:[%s467 + $0x38] sm:$0xff] %vm846, %v821
        %855 = vst.msk [vmem:[%s467 + $0x40] sm:$0xff] %vm846, %v822
        %856 = vst.msk [vmem:[%s467 + $0x48] sm:$0xff] %vm846, %v823
        %857 = vst.msk [vmem:[%s467 + $0x50] sm:$0xff] %vm846, %v824
        %858 = vst.msk [vmem:[%s467 + $0x58] sm:$0xff] %vm846, %v825
        %859 = vst.msk [vmem:[%s467 + $0x60] sm:$0xff] %vm846, %v826
        %860 = vst.msk [vmem:[%s467 + $0x68] sm:$0xff] %vm846, %v827
        %861 = vst.msk [vmem:[%s467 + $0x70] sm:$0xff] %vm846, %v828
        %862 = vst.msk [vmem:[%s467 + $0x78] sm:$0xff] %vm846, %v829
        %863 = vst.msk [vmem:[%s467 + $0x80] sm:$0xff] %vm846, %v830
        %864 = vst.msk [vmem:[%s467 + $0x88] sm:$0xff] %vm846, %v831
        %865 = vst.msk [vmem:[%s467 + $0x90] sm:$0xff] %vm846, %v832
        %866 = vst.msk [vmem:[%s467 + $0x98] sm:$0xff] %vm846, %v833
        %867 = vst.msk [vmem:[%s467 + $0xa0] sm:$0xff] %vm846, %v834
        %868 = vst.msk [vmem:[%s467 + $0xa8] sm:$0xff] %vm846, %v835
        %869 = vst.msk [vmem:[%s467 + $0xb0] sm:$0xff] %vm846, %v836
        %870 = vst.msk [vmem:[%s467 + $0xb8] sm:$0xff] %vm846, %v837
        %871 = vst.msk [vmem:[%s467 + $0xc0] sm:$0xff] %vm846, %v838
        %872 = vst.msk [vmem:[%s467 + $0xc8] sm:$0xff] %vm846, %v839
        %873 = vst.msk [vmem:[%s467 + $0xd0] sm:$0xff] %vm846, %v840
        %874 = vst.msk [vmem:[%s467 + $0xd8] sm:$0xff] %vm846, %v841
        %875 = vst.msk [vmem:[%s467 + $0xe0] sm:$0xff] %vm846, %v842
        %876 = vst.msk [vmem:[%s467 + $0xe8] sm:$0xff] %vm846, %v843
        %877 = vst.msk [vmem:[%s467 + $0xf0] sm:$0xff] %vm846, %v844
        %878 = vst.msk [vmem:[%s467 + $0xf8] sm:$0xff] %vm846, %v845
        %s879 = sand.u32 %s122, 1
        %s880 = sand.u32 %s122, 1
        %s881 = smul.addr %s880, 256
        %s882 = scalar_lea.vmem [#allocation3], %s881
        // Predicated region
        $region89: #{tpu_custom_call.1} parent=83 // pred_check
          %p883 = pneg %p132
        $region90: #{tpu_custom_call.1} parent=83 // pred_check_branch
          %885 = sbr.rel (%p883) target = $region92
        $region91: #{tpu_custom_call.1} parent=83 // pred_region
          %s886 = smul.u32 16, %s15
          %s887 = ssub.s32 25, %s886
          %p888 = scmp.lt.s32.totalorder %s887, 16
          %s889 = scalar_select %p888, %s887, 16
          %s890 = smul.u32 256, %s889
          %p891 = scmp.ne.s32.totalorder 0, %s890
          %s892 = smul.addr %s886, 8
          %s893 = scalar_lea.vmem %s4, %s892
          // Predicated region
          $region93: #{tpu_custom_call.1} parent=91 // pred_check
            %p894 = pneg %p891
          $region94: #{tpu_custom_call.1} parent=91 // pred_check_branch
            %896 = sbr.rel (%p894) target = $region96
          $region95: #{tpu_custom_call.1} parent=91 // pred_region
            // Predicated region
            $region97: #{tpu_custom_call.1} parent=95 // pred_check
              _
            $region98: #{tpu_custom_call.1} parent=95 // pred_check_branch
              %898 = sbr.rel (0) target = $region100
            $region99: #{tpu_custom_call.1} parent=95 // pred_region
              // Predicated region
              $region119: #{tpu_custom_call.1} parent=99 // pred_check
                _
              $region120: #{tpu_custom_call.1} parent=99 // pred_check_branch
                %1011 = sbr.rel (0) target = $region122
              $region121: #{tpu_custom_call.1} parent=99 // pred_region
                %s1012 = sshrl.u32 %s889, 4
                // While loop
                $region123: #{tpu_custom_call.1} parent=121 // loop_pre_header
                  _
                $region124: #{tpu_custom_call.1} parent=121 // loop_header
                  %s1014 = sphi 0, %s1016
                  %p1015 = scmp.ge.s32.totalorder %s1014, %s1012
                  %s1019 = sphi 0, %s1088
                  %s1020 = sphi %s882, %s1091
                  %s1021 = sphi %s893, %s1092
                $region125: #{tpu_custom_call.1} parent=121 // loop_header_branch
                  %1018 = sbr.rel (%p1015) target = $region129
                $region126: #{tpu_custom_call.1} parent=121 // loop_body
                  %v1022 = vld [vmem:[%s1020] sm:$0xff]
                  %1023 = vst [vmem:[%s1021] sm:$0xff] %v1022
                  %v1024 = vld [vmem:[%s1020 + $0x8] sm:$0xff]
                  %1025 = vst [vmem:[%s1021 + $0x8] sm:$0xff] %v1024
                  %v1026 = vld [vmem:[%s1020 + $0x10] sm:$0xff]
                  %1027 = vst [vmem:[%s1021 + $0x10] sm:$0xff] %v1026
                  %v1028 = vld [vmem:[%s1020 + $0x18] sm:$0xff]
                  %1029 = vst [vmem:[%s1021 + $0x18] sm:$0xff] %v1028
                  %v1030 = vld [vmem:[%s1020 + $0x20] sm:$0xff]
                  %1031 = vst [vmem:[%s1021 + $0x20] sm:$0xff] %v1030
                  %v1032 = vld [vmem:[%s1020 + $0x28] sm:$0xff]
                  %1033 = vst [vmem:[%s1021 + $0x28] sm:$0xff] %v1032
                  %v1034 = vld [vmem:[%s1020 + $0x30] sm:$0xff]
                  %1035 = vst [vmem:[%s1021 + $0x30] sm:$0xff] %v1034
                  %v1036 = vld [vmem:[%s1020 + $0x38] sm:$0xff]
                  %1037 = vst [vmem:[%s1021 + $0x38] sm:$0xff] %v1036
                  %v1038 = vld [vmem:[%s1020 + $0x40] sm:$0xff]
                  %1039 = vst [vmem:[%s1021 + $0x40] sm:$0xff] %v1038
                  %v1040 = vld [vmem:[%s1020 + $0x48] sm:$0xff]
                  %1041 = vst [vmem:[%s1021 + $0x48] sm:$0xff] %v1040
                  %v1042 = vld [vmem:[%s1020 + $0x50] sm:$0xff]
                  %1043 = vst [vmem:[%s1021 + $0x50] sm:$0xff] %v1042
                  %v1044 = vld [vmem:[%s1020 + $0x58] sm:$0xff]
                  %1045 = vst [vmem:[%s1021 + $0x58] sm:$0xff] %v1044
                  %v1046 = vld [vmem:[%s1020 + $0x60] sm:$0xff]
                  %1047 = vst [vmem:[%s1021 + $0x60] sm:$0xff] %v1046
                  %v1048 = vld [vmem:[%s1020 + $0x68] sm:$0xff]
                  %1049 = vst [vmem:[%s1021 + $0x68] sm:$0xff] %v1048
                  %v1050 = vld [vmem:[%s1020 + $0x70] sm:$0xff]
                  %1051 = vst [vmem:[%s1021 + $0x70] sm:$0xff] %v1050
                  %v1052 = vld [vmem:[%s1020 + $0x78] sm:$0xff]
                  %1053 = vst [vmem:[%s1021 + $0x78] sm:$0xff] %v1052
                  %v1054 = vld [vmem:[%s1020 + $0x80] sm:$0xff]
                  %1055 = vst [vmem:[%s1021 + $0xc8] sm:$0xff] %v1054
                  %v1056 = vld [vmem:[%s1020 + $0x88] sm:$0xff]
                  %1057 = vst [vmem:[%s1021 + $0xd0] sm:$0xff] %v1056
                  %v1058 = vld [vmem:[%s1020 + $0x90] sm:$0xff]
                  %1059 = vst [vmem:[%s1021 + $0xd8] sm:$0xff] %v1058
                  %v1060 = vld [vmem:[%s1020 + $0x98] sm:$0xff]
                  %1061 = vst [vmem:[%s1021 + $0xe0] sm:$0xff] %v1060
                  %v1062 = vld [vmem:[%s1020 + $0xa0] sm:$0xff]
                  %1063 = vst [vmem:[%s1021 + $0xe8] sm:$0xff] %v1062
                  %v1064 = vld [vmem:[%s1020 + $0xa8] sm:$0xff]
                  %1065 = vst [vmem:[%s1021 + $0xf0] sm:$0xff] %v1064
                  %v1066 = vld [vmem:[%s1020 + $0xb0] sm:$0xff]
                  %1067 = vst [vmem:[%s1021 + $0xf8] sm:$0xff] %v1066
                  %v1068 = vld [vmem:[%s1020 + $0xb8] sm:$0xff]
                  %1069 = vst [vmem:[%s1021 + $0x100] sm:$0xff] %v1068
                  %v1070 = vld [vmem:[%s1020 + $0xc0] sm:$0xff]
                  %1071 = vst [vmem:[%s1021 + $0x108] sm:$0xff] %v1070
                  %v1072 = vld [vmem:[%s1020 + $0xc8] sm:$0xff]
                  %1073 = vst [vmem:[%s1021 + $0x110] sm:$0xff] %v1072
                  %v1074 = vld [vmem:[%s1020 + $0xd0] sm:$0xff]
                  %1075 = vst [vmem:[%s1021 + $0x118] sm:$0xff] %v1074
                  %v1076 = vld [vmem:[%s1020 + $0xd8] sm:$0xff]
                  %1077 = vst [vmem:[%s1021 + $0x120] sm:$0xff] %v1076
                  %v1078 = vld [vmem:[%s1020 + $0xe0] sm:$0xff]
                  %1079 = vst [vmem:[%s1021 + $0x128] sm:$0xff] %v1078
                  %v1080 = vld [vmem:[%s1020 + $0xe8] sm:$0xff]
                  %1081 = vst [vmem:[%s1021 + $0x130] sm:$0xff] %v1080
                  %v1082 = vld [vmem:[%s1020 + $0xf0] sm:$0xff]
                  %1083 = vst [vmem:[%s1021 + $0x138] sm:$0xff] %v1082
                  %v1084 = vld [vmem:[%s1020 + $0xf8] sm:$0xff]
                  %1085 = vst [vmem:[%s1021 + $0x140] sm:$0xff] %v1084
                  %s1086 = sadd.s32 1, %s1019
                  %p1087 = scmp.ge.s32.totalorder %s1086, %s1012
                  %s1088 = scalar_select %p1087, 0, %s1086
                  %s1089 = smul.u32 %s1088, 128
                  %s1090 = smul.u32 %s1088, 128
                  %s1091 = scalar_lea.vmem %s882, %s1089 [#allocation3]
                  %s1092 = scalar_lea.vmem %s893, %s1090
                $region127: #{tpu_custom_call.1} parent=121 // loop_footer
                  %s1016 = sadd.s32 %s1014, 1
                $region128: #{tpu_custom_call.1} parent=121 // loop_footer_branch
                  %1013 = sbr.rel target = $region124
                $region129: #{tpu_custom_call.1} parent=121 // loop_exit
                  _
                %s1093 = sshrl.u32 %s889, 4
                %s1094 = sand.u32 %s889, 15
                %s1095 = smul.u32 %s1093, 16
                %s1096 = smul.u32 8, %s1095
                %s1097 = scalar_lea.vmem %s882, %s1096 [#allocation3]
                %s1098 = smul.u32 8, %s1095
                %s1099 = scalar_lea.vmem %s893, %s1098
                // While loop
                $region130: #{tpu_custom_call.1} parent=121 // loop_pre_header
                  _
                $region131: #{tpu_custom_call.1} parent=121 // loop_header
                  %s1101 = sphi 0, %s1103
                  %p1102 = scmp.ge.s32.totalorder %s1101, %s1094
                  %s1106 = sphi 0, %s1115
                  %s1107 = sphi %s1097, %s1118
                  %s1108 = sphi %s1099, %s1119
                $region132: #{tpu_custom_call.1} parent=121 // loop_header_branch
                  %1105 = sbr.rel (%p1102) target = $region136
                $region133: #{tpu_custom_call.1} parent=121 // loop_body
                  %v1109 = vld [vmem:[%s1107] sm:$0xff]
                  %1110 = vst [vmem:[%s1108] sm:$0xff] %v1109
                  %v1111 = vld [vmem:[%s1107 + $0x80] sm:$0xff]
                  %1112 = vst [vmem:[%s1108 + $0xc8] sm:$0xff] %v1111
                  %s1113 = sadd.s32 1, %s1106
                  %p1114 = scmp.ge.s32.totalorder %s1113, %s1094
                  %s1115 = scalar_select %p1114, 0, %s1113
                  %s1116 = smul.u32 %s1115, 8
                  %s1117 = smul.u32 %s1115, 8
                  %s1118 = scalar_lea.vmem %s1097, %s1116 [#allocation3]
                  %s1119 = scalar_lea.vmem %s1099, %s1117
                $region134: #{tpu_custom_call.1} parent=121 // loop_footer
                  %s1103 = sadd.s32 %s1101, 1
                $region135: #{tpu_custom_call.1} parent=121 // loop_footer_branch
                  %1100 = sbr.rel target = $region131
                $region136: #{tpu_custom_call.1} parent=121 // loop_exit
                  _
              $region122: #{tpu_custom_call.1} parent=99 // pred_fallthru
                _
              // Predicated region
              $region137: #{tpu_custom_call.1} parent=99 // pred_check
                _
              $region138: #{tpu_custom_call.1} parent=99 // pred_check_branch
                %1121 = sbr.rel target = $region140
              $region139: #{tpu_custom_call.1} parent=99 // pred_region
                _
              $region140: #{tpu_custom_call.1} parent=99 // pred_fallthru
                _
            $region100: #{tpu_custom_call.1} parent=95 // pred_fallthru
              _
            // Predicated region
            $region101: #{tpu_custom_call.1} parent=95 // pred_check
              _
            $region102: #{tpu_custom_call.1} parent=95 // pred_check_branch
              %900 = sbr.rel target = $region104
            $region103: #{tpu_custom_call.1} parent=95 // pred_region
              %s902 = sshrl.u32 %s889, 4
              // While loop
              $region105: #{tpu_custom_call.1} parent=103 // loop_pre_header
                _
              $region106: #{tpu_custom_call.1} parent=103 // loop_header
                %s904 = sphi 0, %s906
                %p905 = scmp.ge.s32.totalorder %s904, %s902
                %s909 = sphi 0, %s978
                %s910 = sphi %s882, %s981
                %s911 = sphi %s893, %s982
              $region107: #{tpu_custom_call.1} parent=103 // loop_header_branch
                %908 = sbr.rel (%p905) target = $region111
              $region108: #{tpu_custom_call.1} parent=103 // loop_body
                %v912 = vld [vmem:[%s910] sm:$0xff]
                %913 = vst [vmem:[%s911] sm:$0xff] %v912
                %v914 = vld [vmem:[%s910 + $0x8] sm:$0xff]
                %915 = vst [vmem:[%s911 + $0x8] sm:$0xff] %v914
                %v916 = vld [vmem:[%s910 + $0x10] sm:$0xff]
                %917 = vst [vmem:[%s911 + $0x10] sm:$0xff] %v916
                %v918 = vld [vmem:[%s910 + $0x18] sm:$0xff]
                %919 = vst [vmem:[%s911 + $0x18] sm:$0xff] %v918
                %v920 = vld [vmem:[%s910 + $0x20] sm:$0xff]
                %921 = vst [vmem:[%s911 + $0x20] sm:$0xff] %v920
                %v922 = vld [vmem:[%s910 + $0x28] sm:$0xff]
                %923 = vst [vmem:[%s911 + $0x28] sm:$0xff] %v922
                %v924 = vld [vmem:[%s910 + $0x30] sm:$0xff]
                %925 = vst [vmem:[%s911 + $0x30] sm:$0xff] %v924
                %v926 = vld [vmem:[%s910 + $0x38] sm:$0xff]
                %927 = vst [vmem:[%s911 + $0x38] sm:$0xff] %v926
                %v928 = vld [vmem:[%s910 + $0x40] sm:$0xff]
                %929 = vst [vmem:[%s911 + $0x40] sm:$0xff] %v928
                %v930 = vld [vmem:[%s910 + $0x48] sm:$0xff]
                %931 = vst [vmem:[%s911 + $0x48] sm:$0xff] %v930
                %v932 = vld [vmem:[%s910 + $0x50] sm:$0xff]
                %933 = vst [vmem:[%s911 + $0x50] sm:$0xff] %v932
                %v934 = vld [vmem:[%s910 + $0x58] sm:$0xff]
                %935 = vst [vmem:[%s911 + $0x58] sm:$0xff] %v934
                %v936 = vld [vmem:[%s910 + $0x60] sm:$0xff]
                %937 = vst [vmem:[%s911 + $0x60] sm:$0xff] %v936
                %v938 = vld [vmem:[%s910 + $0x68] sm:$0xff]
                %939 = vst [vmem:[%s911 + $0x68] sm:$0xff] %v938
                %v940 = vld [vmem:[%s910 + $0x70] sm:$0xff]
                %941 = vst [vmem:[%s911 + $0x70] sm:$0xff] %v940
                %v942 = vld [vmem:[%s910 + $0x78] sm:$0xff]
                %943 = vst [vmem:[%s911 + $0x78] sm:$0xff] %v942
                %v944 = vld [vmem:[%s910 + $0x80] sm:$0xff]
                %945 = vst [vmem:[%s911 + $0xc8] sm:$0xff] %v944
                %v946 = vld [vmem:[%s910 + $0x88] sm:$0xff]
                %947 = vst [vmem:[%s911 + $0xd0] sm:$0xff] %v946
                %v948 = vld [vmem:[%s910 + $0x90] sm:$0xff]
                %949 = vst [vmem:[%s911 + $0xd8] sm:$0xff] %v948
                %v950 = vld [vmem:[%s910 + $0x98] sm:$0xff]
                %951 = vst [vmem:[%s911 + $0xe0] sm:$0xff] %v950
                %v952 = vld [vmem:[%s910 + $0xa0] sm:$0xff]
                %953 = vst [vmem:[%s911 + $0xe8] sm:$0xff] %v952
                %v954 = vld [vmem:[%s910 + $0xa8] sm:$0xff]
                %955 = vst [vmem:[%s911 + $0xf0] sm:$0xff] %v954
                %v956 = vld [vmem:[%s910 + $0xb0] sm:$0xff]
                %957 = vst [vmem:[%s911 + $0xf8] sm:$0xff] %v956
                %v958 = vld [vmem:[%s910 + $0xb8] sm:$0xff]
                %959 = vst [vmem:[%s911 + $0x100] sm:$0xff] %v958
                %v960 = vld [vmem:[%s910 + $0xc0] sm:$0xff]
                %961 = vst [vmem:[%s911 + $0x108] sm:$0xff] %v960
                %v962 = vld [vmem:[%s910 + $0xc8] sm:$0xff]
                %963 = vst [vmem:[%s911 + $0x110] sm:$0xff] %v962
                %v964 = vld [vmem:[%s910 + $0xd0] sm:$0xff]
                %965 = vst [vmem:[%s911 + $0x118] sm:$0xff] %v964
                %v966 = vld [vmem:[%s910 + $0xd8] sm:$0xff]
                %967 = vst [vmem:[%s911 + $0x120] sm:$0xff] %v966
                %v968 = vld [vmem:[%s910 + $0xe0] sm:$0xff]
                %969 = vst [vmem:[%s911 + $0x128] sm:$0xff] %v968
                %v970 = vld [vmem:[%s910 + $0xe8] sm:$0xff]
                %971 = vst [vmem:[%s911 + $0x130] sm:$0xff] %v970
                %v972 = vld [vmem:[%s910 + $0xf0] sm:$0xff]
                %973 = vst [vmem:[%s911 + $0x138] sm:$0xff] %v972
                %v974 = vld [vmem:[%s910 + $0xf8] sm:$0xff]
                %975 = vst [vmem:[%s911 + $0x140] sm:$0xff] %v974
                %s976 = sadd.s32 1, %s909
                %p977 = scmp.ge.s32.totalorder %s976, %s902
                %s978 = scalar_select %p977, 0, %s976
                %s979 = smul.u32 %s978, 128
                %s980 = smul.u32 %s978, 128
                %s981 = scalar_lea.vmem %s882, %s979 [#allocation3]
                %s982 = scalar_lea.vmem %s893, %s980
              $region109: #{tpu_custom_call.1} parent=103 // loop_footer
                %s906 = sadd.s32 %s904, 1
              $region110: #{tpu_custom_call.1} parent=103 // loop_footer_branch
                %903 = sbr.rel target = $region106
              $region111: #{tpu_custom_call.1} parent=103 // loop_exit
                _
              %s983 = sshrl.u32 %s889, 4
              %s984 = sand.u32 %s889, 15
              %s985 = smul.u32 %s983, 16
              %s986 = smul.u32 8, %s985
              %s987 = scalar_lea.vmem %s882, %s986 [#allocation3]
              %s988 = smul.u32 8, %s985
              %s989 = scalar_lea.vmem %s893, %s988
              // While loop
              $region112: #{tpu_custom_call.1} parent=103 // loop_pre_header
                _
              $region113: #{tpu_custom_call.1} parent=103 // loop_header
                %s991 = sphi 0, %s993
                %p992 = scmp.ge.s32.totalorder %s991, %s984
                %s996 = sphi 0, %s1005
                %s997 = sphi %s987, %s1008
                %s998 = sphi %s989, %s1009
              $region114: #{tpu_custom_call.1} parent=103 // loop_header_branch
                %995 = sbr.rel (%p992) target = $region118
              $region115: #{tpu_custom_call.1} parent=103 // loop_body
                %v999 = vld [vmem:[%s997] sm:$0xff]
                %1000 = vst [vmem:[%s998] sm:$0xff] %v999
                %v1001 = vld [vmem:[%s997 + $0x80] sm:$0xff]
                %1002 = vst [vmem:[%s998 + $0xc8] sm:$0xff] %v1001
                %s1003 = sadd.s32 1, %s996
                %p1004 = scmp.ge.s32.totalorder %s1003, %s984
                %s1005 = scalar_select %p1004, 0, %s1003
                %s1006 = smul.u32 %s1005, 8
                %s1007 = smul.u32 %s1005, 8
                %s1008 = scalar_lea.vmem %s987, %s1006 [#allocation3]
                %s1009 = scalar_lea.vmem %s989, %s1007
              $region116: #{tpu_custom_call.1} parent=103 // loop_footer
                %s993 = sadd.s32 %s991, 1
              $region117: #{tpu_custom_call.1} parent=103 // loop_footer_branch
                %990 = sbr.rel target = $region113
              $region118: #{tpu_custom_call.1} parent=103 // loop_exit
                _
            $region104: #{tpu_custom_call.1} parent=95 // pred_fallthru
              _
          $region96: #{tpu_custom_call.1} parent=91 // pred_fallthru
            _
          %1122 = vnop
        $region92: #{tpu_custom_call.1} parent=83 // pred_fallthru
          _
      $region84: #{tpu_custom_call.1} parent=5 // pred_fallthru
        _
      %p1123 = scmp.le.s32.totalorder 2, %s10
      // Predicated region
      $region141: #{tpu_custom_call.1} parent=5 // pred_check
        %p1124 = pneg %p1123
      $region142: #{tpu_custom_call.1} parent=5 // pred_check_branch
        %1126 = sbr.rel (%p1124) target = $region144
      $region143: #{tpu_custom_call.1} parent=5 // pred_region
        %s1127 = ssub.s32 %s10, 2
        // Predicated region
        $region145: #{tpu_custom_call.1} parent=143 // pred_check
          %p1128 = pneg %p138
        $region146: #{tpu_custom_call.1} parent=143 // pred_check_branch
          %1130 = sbr.rel (%p1128) target = $region148
        $region147: #{tpu_custom_call.1} parent=143 // pred_region
          %s1131 = sand.u32 %s123, 1
          %s1132 = sand.u32 %s123, 1
          %s1133 = smul.addr %s1132, 256
          %s1134 = scalar_lea.vmem [#allocation3], %s1133
        $region148: #{tpu_custom_call.1} parent=143 // pred_fallthru
          _
      $region144: #{tpu_custom_call.1} parent=5 // pred_fallthru
        _
    $region6: #{tpu_custom_call.1} parent=1 // loop_footer
      %s14 = sadd.s32 1, %s10
    $region7: #{tpu_custom_call.1} parent=1 // loop_footer_branch
      %9 = sbr.rel target = $region3
    $region8: #{tpu_custom_call.1} parent=1 // loop_exit
      _

</llo_original>
